<compile_context>
chip_gen: v7x
topology: tpu7x:2x2x1
jax: 0.10.0
libtpu: 0.0.40
codegen_flags: <defaults>
</compile_context>

<pallas_src>
import jax
import jax.numpy as jnp
from jax.experimental import pallas as pl
from jax.experimental.pallas import tpu as pltpu


def _flatten_dma_kernel(x_hbm_ref, o_hbm_ref, sem):
    # One direct HBM -> HBM copy of the whole (already lane-dense) 2D view.
    cp = pltpu.make_async_copy(x_hbm_ref, o_hbm_ref, sem)
    cp.start()
    cp.wait()


def flatten(x: jax.Array) -> jax.Array:
    """Pallas equivalent of PyTorch Flatten: x.view(x.size(0), -1)."""
    b = x.shape[0]
    flat = 1
    for d in x.shape[1:]:
        flat *= d

    # Metadata-only reshape in the wrapper (free for contiguous NCHW input).
    x2 = x.reshape(b, flat)

    itemsize = jnp.dtype(x.dtype).itemsize

    return pl.pallas_call(
        _flatten_dma_kernel,
        out_shape=jax.ShapeDtypeStruct((b, flat), x.dtype),
        in_specs=[pl.BlockSpec(memory_space=pl.ANY)],
        out_specs=pl.BlockSpec(memory_space=pl.ANY),
        scratch_shapes=[pltpu.SemaphoreType.DMA(())],
        cost_estimate=pl.CostEstimate(
            flops=0,
            transcendentals=0,
            bytes_accessed=2 * b * flat * itemsize,
        ),
    )(x2)


if __name__ == "__main__":
    key = jax.random.PRNGKey(0)

    # Small NCHW input consistent with a conv backbone feature map.
    x = jax.random.normal(key, (2, 4, 16, 16), dtype=jnp.float32)
    y = jax.block_until_ready(flatten(x))
    y_ref = x.reshape(x.shape[0], -1)
    assert y.shape == (2, 4 * 16 * 16), y.shape
    assert y.dtype == x.dtype
    assert jnp.array_equal(y, y_ref)

    # bf16 case (same DMA path, exercises a sub-32-bit dtype).
    xb = x.astype(jnp.bfloat16)
    yb = jax.block_until_ready(flatten(xb))
    assert yb.shape == (2, 4 * 16 * 16)
    assert yb.dtype == jnp.bfloat16
    assert jnp.array_equal(yb, xb.reshape(xb.shape[0], -1))

    # Non-aligned flat size (e.g. 7x7 spatial -> flat=3136 not /128): the DMA
    # path is shape-agnostic, no full-dim VMEM block fallback to worry about.
    xo = jax.random.normal(jax.random.PRNGKey(1), (3, 64, 7, 7), jnp.float32)
    yo = jax.block_until_ready(flatten(xo))
    assert yo.shape == (3, 64 * 7 * 7)
    assert jnp.array_equal(yo, xo.reshape(xo.shape[0], -1))

    print("KERNEL_OK")
</pallas_src>

<mosaic_0001>
module attributes {stable_mosaic.version = 11 : i64} {
  func.func @_flatten_dma_kernel(%arg0: memref<2x1024xf32, #tpu.memory_space<any>>, %arg1: memref<2x1024xf32, #tpu.memory_space<any>>, %arg2: memref<!tpu.dma_semaphore, #tpu.memory_space<semaphore_mem>>) attributes {dimension_semantics = [], scalar_prefetch = 0 : i64, scratch_operands = 1 : i64, tpu.core_type = #tpu.core_type<tc>} {
    tpu.enqueue_dma source(%arg0 : memref<2x1024xf32, #tpu.memory_space<any>>) target(%arg1 : memref<2x1024xf32, #tpu.memory_space<any>>) target_semaphore(%arg2 : memref<!tpu.dma_semaphore, #tpu.memory_space<semaphore_mem>>)
    tpu.wait_dma2 semaphore(%arg2 : memref<!tpu.dma_semaphore, #tpu.memory_space<semaphore_mem>>) src(%arg0 : memref<2x1024xf32, #tpu.memory_space<any>>) dst(%arg1 : memref<2x1024xf32, #tpu.memory_space<any>>)
    return
  }
}

</mosaic_0001>

<llo_original>
// kernel: tpu_custom_call.1
$region0: #{tpu_custom_call.1}
  #allocation0 [shape = 'u32[]', space=smem, size = 0x4, offset = 0x4, fixed_abs, tag = 'smem constant byte address 0x4 - core index']
  #allocation1 [shape = 'u32[144,128]{1,0:T(1,128)}', space=vmem, size = 0x12000, scoped, tag = 'internal scratch']
  #allocation2 [shape = 's32[1]{0}', space=sflag, size = 0x4, scoped, tag = 'scratch operand']
  #allocation3 [shape = 's32[]', space=sflag, size = 0x4, offset = 0, fixed_abs, tag = 'sflag constant byte address 0x0 - dummy sync flag']
  #allocation4 [shape = 'u32[0]{0}', space=smem, size = 0, offset = 0, fixed_abs, tag = 'smem constant byte address 0x0 - null']
  %s0 = inlined_call_operand.hbm [shape: f32[2,1024], index: 0, kind: input, shape index: {}]
  %s1 = inlined_call_operand.hbm [shape: f32[2,1024], index: 1, kind: output, shape index: {}]
  %s2 = sld [smem:[#allocation0]]
  $region2: #{tpu_custom_call.1} parent=0
    _
  %s4 = ssub.s32 1, %s2
  %s5 = scalar_select 0, %s4, %s2
  %s7 = sshll.u32 1, 14
  %s8 = sxor.u32 4294967295, %s7
  %s11 = sshll.u32 3, 24
  %s12 = sxor.u32 4294967295, %s11
  %s13 = sand.u32 0, %s12
  %s15 = sor.u32 %s13, 0
  %18 = dma.general %s0, 256, %s1, [#allocation2], [#allocation3], [#allocation4], %s15, 0
  %s19 = smul.u32 2, 1
  %s20 = smul.u32 %s19, 8
  %s21 = sshll.u32 %s20, 4
  %22 = dma.done [#allocation2], %s21
  %23 = vsyncmov [#allocation2]
  %s24 = vpop.sfrf %23
  %p25 = scmp.eq.s32.totalorder %s24, 0
  %p26 = pneg %p25
  %28 = shalt.err (%p26)

</llo_original>
